<compile_context>
chip_gen: v7x
topology: tpu7x:2x2x1
jax: 0.10.0
libtpu: 0.0.40
codegen_flags: <defaults>
</compile_context>

<pallas_src>
import functools

import jax
import jax.numpy as jnp
from jax.experimental import pallas as pl
from jax.experimental.pallas import tpu as pltpu


def _round_up(x, m):
    return ((x + m - 1) // m) * m


def _vmem_limit_bytes():
    """Generation-aware VMEM cap: ~3/4 of physical, capped at 96 MiB."""
    try:
        cap = pltpu.get_tpu_info().vmem_capacity_bytes
    except Exception:
        cap = 64 * 1024 * 1024
    return int(min(cap * 3 // 4, 96 * 1024 * 1024))


def _make_mlp_kernel(n_branch):
    """Two-layer MLP (x @ w1 + b1 -> ReLU -> @ w2 + b2) applied to `n_branch`
    activation inputs that share the same weights, with a K reduction axis."""

    def kernel(*refs):
        xs = refs[:n_branch]
        w1_ref, b1_ref, w2_ref, b2_ref = refs[n_branch:n_branch + 4]
        outs = refs[n_branch + 4:2 * n_branch + 4]
        accs = refs[2 * n_branch + 4:]

        k = pl.program_id(1)

        @pl.when(k == 0)
        def _init():
            for acc in accs:
                acc[...] = jnp.zeros_like(acc)

        w1 = w1_ref[...]                                    # bf16, VMEM-resident
        for x_ref, acc in zip(xs, accs):
            acc[...] += jnp.dot(x_ref[...].astype(w1.dtype), w1,
                                preferred_element_type=jnp.float32)

        @pl.when(k == pl.num_programs(1) - 1)
        def _finalize():
            b1 = b1_ref[...]
            w2 = w2_ref[...]
            b2 = b2_ref[...]
            for acc, o_ref in zip(accs, outs):
                h = jnp.maximum(acc[...] + b1, 0.0)         # bias + ReLU in f32
                o = jnp.dot(h.astype(w2.dtype), w2,
                            preferred_element_type=jnp.float32)
                o_ref[...] = (o + b2).astype(o_ref.dtype)   # bf16 writeback

    return kernel


@functools.partial(jax.jit, static_argnums=(0,))
def _mlp_forward(orig_dims, w1_p, b1_p, w2_p, b2_p, *xs_flat):
    """Runs the shared embedding MLP on 1..n flattened (B, D) batches in a
    single pallas_call (shared weights DMA'd once)."""
    D, _, E = orig_dims
    n_branch = len(xs_flat)
    B, Dx = xs_flat[0].shape
    assert Dx == D, (Dx, D)
    D_pad, H_pad = w1_p.shape
    E_pad = w2_p.shape[1]
    x_bytes = xs_flat[0].dtype.itemsize

    # Batch tile: as big as useful (<=512 rows), but keep >=2 grid steps
    # whenever the batch allows so both v7x TensorCores get work.
    if B < 32:
        TM = _round_up(max(B, 16), 16)
    else:
        TM = min(512, _round_up(pl.cdiv(B, 2), 16))
    B_pad = _round_up(B, TM)

    # K (in_features) tiling: keep w1 whole-K and single-buffered when it fits
    # the VMEM budget; otherwise stream it along the reduction grid axis.
    vmem_limit = _vmem_limit_bytes()
    fixed_bytes = (
        H_pad * 4 + H_pad * E_pad * 2 + E_pad * 4           # b1, w2, b2 (1-buffered)
        + n_branch * 2 * TM * E_pad * 2                     # bf16 out tiles (2-buffered)
        + n_branch * TM * H_pad * 4)                        # f32 hidden accumulators
    budget = max(vmem_limit - fixed_bytes, 2 * 1024 * 1024)

    def _k_footprint(tk, nk):
        w1_bufs = 1 if nk == 1 else 2
        return tk * H_pad * 2 * w1_bufs + n_branch * 2 * TM * tk * x_bytes

    n128 = D_pad // 128
    n_k = n128                                              # fallback: TK = 128
    for cand in range(1, n128 + 1):
        if n128 % cand:
            continue
        if _k_footprint(D_pad // cand, cand) <= budget:
            n_k = cand
            break
    TK = D_pad // n_k

    # Pad activations only when actually misaligned (shapes are static).
    xs_p = []
    for x in xs_flat:
        if B_pad != B or D_pad != D:
            x = jnp.pad(x, ((0, B_pad - B), (0, D_pad - D)))
        xs_p.append(x)

    # Grid-invariant operands -> single-buffered (no pointless double buffer).
    w1_mode = pl.Buffered(1) if n_k == 1 else None
    in_specs = (
        [pl.BlockSpec((TM, TK), lambda i, k: (i, k)) for _ in range(n_branch)]
        + [pl.BlockSpec((TK, H_pad), lambda i, k: (k, 0), pipeline_mode=w1_mode),
           pl.BlockSpec((1, H_pad), lambda i, k: (0, 0),
                        pipeline_mode=pl.Buffered(1)),
           pl.BlockSpec((H_pad, E_pad), lambda i, k: (0, 0),
                        pipeline_mode=pl.Buffered(1)),
           pl.BlockSpec((1, E_pad), lambda i, k: (0, 0),
                        pipeline_mode=pl.Buffered(1))])
    out_specs = [pl.BlockSpec((TM, E_pad), lambda i, k: (i, 0))
                 for _ in range(n_branch)]
    out_shape = [jax.ShapeDtypeStruct((B_pad, E_pad), jnp.bfloat16)
                 for _ in range(n_branch)]
    scratch_shapes = [pltpu.VMEM((TM, H_pad), jnp.float32)
                      for _ in range(n_branch)]

    flops = 2 * n_branch * B_pad * (D_pad * H_pad + H_pad * E_pad)
    bytes_accessed = (
        n_branch * B_pad * D_pad * x_bytes                   # activations (read once)
        + D_pad * H_pad * 2 + H_pad * E_pad * 2              # bf16 weights
        + (H_pad + E_pad) * 4                                # f32 biases
        + n_branch * B_pad * E_pad * 2)                      # bf16 output

    outs = pl.pallas_call(
        _make_mlp_kernel(n_branch),
        out_shape=out_shape,
        grid=(B_pad // TM, n_k),
        in_specs=in_specs,
        out_specs=out_specs,
        scratch_shapes=scratch_shapes,
        compiler_params=pltpu.CompilerParams(
            dimension_semantics=("parallel", "arbitrary"),
            vmem_limit_bytes=vmem_limit),
        cost_estimate=pl.CostEstimate(
            flops=flops, transcendentals=0, bytes_accessed=bytes_accessed),
    )(*xs_p, w1_p, b1_p, w2_p, b2_p)

    # Slice off padding (no-op when already aligned).
    return tuple(o[:B, :E] for o in outs)


def init_params(key, in_features, hidden, emb_dim):
    k1, k2, k3, k4 = jax.random.split(key, 4)
    w1 = jax.random.normal(k1, (in_features, hidden), jnp.float32) * 0.02
    b1 = jax.random.normal(k2, (1, hidden), jnp.float32) * 0.02
    w2 = jax.random.normal(k3, (hidden, emb_dim), jnp.float32) * 0.02
    b2 = jax.random.normal(k4, (1, emb_dim), jnp.float32) * 0.02
    return w1, b1, w2, b2


def prepare_params(params):
    """One-time (8,128)-aligned zero-padding + bf16 cast of the shared weights
    so the per-call path does zero weight re-pad / re-cast work."""
    w1, b1, w2, b2 = params
    D, Hd = w1.shape
    E = w2.shape[1]
    D_pad = _round_up(D, 128)
    H_pad = _round_up(Hd, 128)
    E_pad = _round_up(E, 128)
    w1_p = jnp.zeros((D_pad, H_pad), jnp.bfloat16).at[:D, :Hd].set(
        w1.astype(jnp.bfloat16))
    b1_p = jnp.zeros((1, H_pad), jnp.float32).at[:, :Hd].set(
        b1.reshape(1, -1).astype(jnp.float32))
    w2_p = jnp.zeros((H_pad, E_pad), jnp.bfloat16).at[:Hd, :E].set(
        w2.astype(jnp.bfloat16))
    b2_p = jnp.zeros((1, E_pad), jnp.float32).at[:, :E].set(
        b2.reshape(1, -1).astype(jnp.float32))
    return {"w1": w1_p, "b1": b1_p, "w2": w2_p, "b2": b2_p,
            "dims": (int(D), int(Hd), int(E))}


def embedding_net(x_nchw, prepared):
    """SiameseNet.get_embedding."""
    x = x_nchw.reshape(x_nchw.shape[0], -1)                  # torch .view(N, -1)
    (out,) = _mlp_forward(prepared["dims"], prepared["w1"], prepared["b1"],
                          prepared["w2"], prepared["b2"], x)
    return out


def siamese_net(x1, x2, prepared):
    """SiameseNet.forward: shared-weight embedding of both inputs in ONE
    pallas_call (weights DMA'd once, no concat copy of the activations)."""
    f1 = x1.reshape(x1.shape[0], -1)
    f2 = x2.reshape(x2.shape[0], -1)
    return _mlp_forward(prepared["dims"], prepared["w1"], prepared["b1"],
                        prepared["w2"], prepared["b2"], f1, f2)


if __name__ == "__main__":
    key = jax.random.PRNGKey(0)
    kx1, kx2, kp = jax.random.split(key, 3)

    # Small shapes: batch=2, channels=4, spatial=16x16, hidden=32, emb=16
    N, C, H, W = 2, 4, 16, 16
    hidden, emb_dim = 32, 16

    x1 = jax.random.normal(kx1, (N, C, H, W), jnp.float32)
    x2 = jax.random.normal(kx2, (N, C, H, W), jnp.float32)
    raw_params = init_params(kp, C * H * W, hidden, emb_dim)
    params = prepare_params(raw_params)        # one-time pad + bf16 cast

    out1, out2 = siamese_net(x1, x2, params)
    jax.block_until_ready((out1, out2))

    # Reference with the same bf16-operand / f32-accumulate recipe.
    def ref_embed(x):
        w1, b1, w2, b2 = raw_params
        xb = x.reshape(x.shape[0], -1).astype(jnp.bfloat16)
        h = jnp.dot(xb, w1.astype(jnp.bfloat16),
                    preferred_element_type=jnp.float32) + b1
        h = jnp.maximum(h, 0.0)
        o = jnp.dot(h.astype(jnp.bfloat16), w2.astype(jnp.bfloat16),
                    preferred_element_type=jnp.float32) + b2
        return o

    assert out1.shape == (N, emb_dim) and out2.shape == (N, emb_dim)
    assert jnp.allclose(out1.astype(jnp.float32), ref_embed(x1),
                        atol=1e-2, rtol=1e-2)
    assert jnp.allclose(out2.astype(jnp.float32), ref_embed(x2),
                        atol=1e-2, rtol=1e-2)

    # get_embedding path uses the same shared weights / kernel.
    emb = embedding_net(x1, params)
    jax.block_until_ready(emb)
    assert jnp.allclose(emb.astype(jnp.float32), out1.astype(jnp.float32),
                        atol=1e-2, rtol=1e-2)

    print("KERNEL_OK")
</pallas_src>

<mosaic_0001>
module attributes {stable_mosaic.version = 11 : i64} {
  func.func @kernel(%arg0: i32, %arg1: i32, %arg2: memref<16x1024xf32, #tpu.memory_space<vmem>>, %arg3: memref<16x1024xf32, #tpu.memory_space<vmem>>, %arg4: memref<1024x128xbf16, #tpu.memory_space<vmem>>, %arg5: memref<1x128xf32, #tpu.memory_space<vmem>>, %arg6: memref<128x128xbf16, #tpu.memory_space<vmem>>, %arg7: memref<1x128xf32, #tpu.memory_space<vmem>>, %arg8: memref<16x128xbf16, #tpu.memory_space<vmem>>, %arg9: memref<16x128xbf16, #tpu.memory_space<vmem>>, %arg10: memref<16x128xf32, #tpu.memory_space<vmem>>, %arg11: memref<16x128xf32, #tpu.memory_space<vmem>>) attributes {dimension_semantics = [#tpu.dimension_semantics<parallel>, #tpu.dimension_semantics<arbitrary>], iteration_bounds = array<i64: 1, 1>, scalar_prefetch = 0 : i64, scratch_operands = 2 : i64, tpu.core_type = #tpu.core_type<tc>, window_params = [{transform_indices = @transform_0, window_bounds = array<i64: 16, 1024>}, {transform_indices = @transform_1, window_bounds = array<i64: 16, 1024>}, {pipeline_mode = #tpu.pipeline_mode<synchronous>, transform_indices = @transform_2, window_bounds = array<i64: 1024, 128>}, {pipeline_mode = #tpu.pipeline_mode<synchronous>, transform_indices = @transform_3, window_bounds = array<i64: 1, 128>}, {pipeline_mode = #tpu.pipeline_mode<synchronous>, transform_indices = @transform_4, window_bounds = array<i64: 128, 128>}, {pipeline_mode = #tpu.pipeline_mode<synchronous>, transform_indices = @transform_5, window_bounds = array<i64: 1, 128>}, {transform_indices = @transform_6, window_bounds = array<i64: 16, 128>}, {transform_indices = @transform_7, window_bounds = array<i64: 16, 128>}]} {
    %c0_i32 = arith.constant 0 : i32
    %0 = arith.cmpi eq, %arg1, %c0_i32 : i32
    %1 = arith.extui %0 : i1 to i32
    %c0_i32_0 = arith.constant 0 : i32
    %2 = arith.cmpi ne, %1, %c0_i32_0 : i32
    scf.if %2 {
      %cst_17 = arith.constant 0.000000e+00 : f32
      %19 = vector.broadcast %cst_17 : f32 to vector<16x128xf32>
      %c0_18 = arith.constant 0 : index
      %c0_19 = arith.constant 0 : index
      %20 = vector.load %arg10[%c0_18, %c0_19] : memref<16x128xf32, #tpu.memory_space<vmem>>, vector<16x128xf32>
      tpu.vector_store %arg10[%c0_18, %c0_19], %19 {strides = array<i32>} : memref<16x128xf32, #tpu.memory_space<vmem>>, vector<16x128xf32>,
      %cst_20 = arith.constant 0.000000e+00 : f32
      %21 = vector.broadcast %cst_20 : f32 to vector<16x128xf32>
      %c0_21 = arith.constant 0 : index
      %c0_22 = arith.constant 0 : index
      %22 = vector.load %arg11[%c0_21, %c0_22] : memref<16x128xf32, #tpu.memory_space<vmem>>, vector<16x128xf32>
      tpu.vector_store %arg11[%c0_21, %c0_22], %21 {strides = array<i32>} : memref<16x128xf32, #tpu.memory_space<vmem>>, vector<16x128xf32>,
    } else {
    }
    %c0 = arith.constant 0 : index
    %c0_1 = arith.constant 0 : index
    %3 = vector.load %arg4[%c0, %c0_1] : memref<1024x128xbf16, #tpu.memory_space<vmem>>, vector<1024x128xbf16>
    %c0_2 = arith.constant 0 : index
    %c0_3 = arith.constant 0 : index
    %4 = vector.load %arg10[%c0_2, %c0_3] : memref<16x128xf32, #tpu.memory_space<vmem>>, vector<16x128xf32>
    %c0_4 = arith.constant 0 : index
    %c0_5 = arith.constant 0 : index
    %5 = vector.load %arg2[%c0_4, %c0_5] : memref<16x1024xf32, #tpu.memory_space<vmem>>, vector<16x1024xf32>
    %6 = arith.truncf %5 : vector<16x1024xf32> to vector<16x1024xbf16>
    %cst = arith.constant dense<0.000000e+00> : vector<16x128xf32>
    %7 = tpu.matmul %6, %3, %cst {dimension_numbers = #tpu.dot_dimension_numbers<[1], [0], [0], [1], [0, 0, 1, 1], [], []>} : vector<16x1024xbf16>, vector<1024x128xbf16>, vector<16x128xf32> -> vector<16x128xf32>
    %8 = arith.addf %4, %7 : vector<16x128xf32>
    %c0_6 = arith.constant 0 : index
    %c0_7 = arith.constant 0 : index
    %9 = vector.load %arg10[%c0_6, %c0_7] : memref<16x128xf32, #tpu.memory_space<vmem>>, vector<16x128xf32>
    tpu.vector_store %arg10[%c0_6, %c0_7], %8 {strides = array<i32>} : memref<16x128xf32, #tpu.memory_space<vmem>>, vector<16x128xf32>,
    %c0_8 = arith.constant 0 : index
    %c0_9 = arith.constant 0 : index
    %10 = vector.load %arg11[%c0_8, %c0_9] : memref<16x128xf32, #tpu.memory_space<vmem>>, vector<16x128xf32>
    %c0_10 = arith.constant 0 : index
    %c0_11 = arith.constant 0 : index
    %11 = vector.load %arg3[%c0_10, %c0_11] : memref<16x1024xf32, #tpu.memory_space<vmem>>, vector<16x1024xf32>
    %12 = arith.truncf %11 : vector<16x1024xf32> to vector<16x1024xbf16>
    %cst_12 = arith.constant dense<0.000000e+00> : vector<16x128xf32>
    %13 = tpu.matmul %12, %3, %cst_12 {dimension_numbers = #tpu.dot_dimension_numbers<[1], [0], [0], [1], [0, 0, 1, 1], [], []>} : vector<16x1024xbf16>, vector<1024x128xbf16>, vector<16x128xf32> -> vector<16x128xf32>
    %14 = arith.addf %10, %13 : vector<16x128xf32>
    %c0_13 = arith.constant 0 : index
    %c0_14 = arith.constant 0 : index
    %15 = vector.load %arg11[%c0_13, %c0_14] : memref<16x128xf32, #tpu.memory_space<vmem>>, vector<16x128xf32>
    tpu.vector_store %arg11[%c0_13, %c0_14], %14 {strides = array<i32>} : memref<16x128xf32, #tpu.memory_space<vmem>>, vector<16x128xf32>,
    %c0_i32_15 = arith.constant 0 : i32
    %16 = arith.cmpi eq, %arg1, %c0_i32_15 : i32
    %17 = arith.extui %16 : i1 to i32
    %c0_i32_16 = arith.constant 0 : i32
    %18 = arith.cmpi ne, %17, %c0_i32_16 : i32
    scf.if %18 {
      %c0_17 = arith.constant 0 : index
      %c0_18 = arith.constant 0 : index
      %19 = vector.load %arg5[%c0_17, %c0_18] : memref<1x128xf32, #tpu.memory_space<vmem>>, vector<1x128xf32>
      %c0_19 = arith.constant 0 : index
      %c0_20 = arith.constant 0 : index
      %20 = vector.load %arg6[%c0_19, %c0_20] : memref<128x128xbf16, #tpu.memory_space<vmem>>, vector<128x128xbf16>
      %c0_21 = arith.constant 0 : index
      %c0_22 = arith.constant 0 : index
      %21 = vector.load %arg7[%c0_21, %c0_22] : memref<1x128xf32, #tpu.memory_space<vmem>>, vector<1x128xf32>
      %c0_23 = arith.constant 0 : index
      %c0_24 = arith.constant 0 : index
      %22 = vector.load %arg10[%c0_23, %c0_24] : memref<16x128xf32, #tpu.memory_space<vmem>>, vector<16x128xf32>
      %23 = vector.broadcast %19 : vector<1x128xf32> to vector<16x128xf32>
      %24 = arith.addf %22, %23 : vector<16x128xf32>
      %cst_25 = arith.constant 0.000000e+00 : f32
      %25 = vector.broadcast %cst_25 : f32 to vector<16x128xf32>
      %26 = arith.maximumf %24, %25 : vector<16x128xf32>
      %27 = arith.truncf %26 : vector<16x128xf32> to vector<16x128xbf16>
      %cst_26 = arith.constant dense<0.000000e+00> : vector<16x128xf32>
      %28 = tpu.matmul %27, %20, %cst_26 {dimension_numbers = #tpu.dot_dimension_numbers<[1], [0], [0], [1], [0, 0, 1, 1], [], []>} : vector<16x128xbf16>, vector<128x128xbf16>, vector<16x128xf32> -> vector<16x128xf32>
      %29 = vector.broadcast %21 : vector<1x128xf32> to vector<16x128xf32>
      %30 = arith.addf %28, %29 : vector<16x128xf32>
      %31 = arith.truncf %30 : vector<16x128xf32> to vector<16x128xbf16>
      %c0_27 = arith.constant 0 : index
      %c0_28 = arith.constant 0 : index
      %32 = vector.load %arg8[%c0_27, %c0_28] : memref<16x128xbf16, #tpu.memory_space<vmem>>, vector<16x128xbf16>
      tpu.vector_store %arg8[%c0_27, %c0_28], %31 {strides = array<i32>} : memref<16x128xbf16, #tpu.memory_space<vmem>>, vector<16x128xbf16>,
      %c0_29 = arith.constant 0 : index
      %c0_30 = arith.constant 0 : index
      %33 = vector.load %arg11[%c0_29, %c0_30] : memref<16x128xf32, #tpu.memory_space<vmem>>, vector<16x128xf32>
      %34 = vector.broadcast %19 : vector<1x128xf32> to vector<16x128xf32>
      %35 = arith.addf %33, %34 : vector<16x128xf32>
      %cst_31 = arith.constant 0.000000e+00 : f32
      %36 = vector.broadcast %cst_31 : f32 to vector<16x128xf32>
      %37 = arith.maximumf %35, %36 : vector<16x128xf32>
      %38 = arith.truncf %37 : vector<16x128xf32> to vector<16x128xbf16>
      %cst_32 = arith.constant dense<0.000000e+00> : vector<16x128xf32>
      %39 = tpu.matmul %38, %20, %cst_32 {dimension_numbers = #tpu.dot_dimension_numbers<[1], [0], [0], [1], [0, 0, 1, 1], [], []>} : vector<16x128xbf16>, vector<128x128xbf16>, vector<16x128xf32> -> vector<16x128xf32>
      %40 = vector.broadcast %21 : vector<1x128xf32> to vector<16x128xf32>
      %41 = arith.addf %39, %40 : vector<16x128xf32>
      %42 = arith.truncf %41 : vector<16x128xf32> to vector<16x128xbf16>
      %c0_33 = arith.constant 0 : index
      %c0_34 = arith.constant 0 : index
      %43 = vector.load %arg9[%c0_33, %c0_34] : memref<16x128xbf16, #tpu.memory_space<vmem>>, vector<16x128xbf16>
      tpu.vector_store %arg9[%c0_33, %c0_34], %42 {strides = array<i32>} : memref<16x128xbf16, #tpu.memory_space<vmem>>, vector<16x128xbf16>,
    } else {
    }
    return
  }
  func.func @transform_0(%arg0: i32, %arg1: i32) -> (i32, i32) {
    %c0_i32 = arith.constant 0 : i32
    return %arg0, %arg1 : i32, i32
  }
  func.func @transform_1(%arg0: i32, %arg1: i32) -> (i32, i32) {
    %c0_i32 = arith.constant 0 : i32
    return %arg0, %arg1 : i32, i32
  }
  func.func @transform_2(%arg0: i32, %arg1: i32) -> (i32, i32) {
    %c0_i32 = arith.constant 0 : i32
    %c0_i32_0 = arith.constant 0 : i32
    return %arg1, %c0_i32 : i32, i32
  }
  func.func @transform_3(%arg0: i32, %arg1: i32) -> (i32, i32) {
    %c0_i32 = arith.constant 0 : i32
    %c0_i32_0 = arith.constant 0 : i32
    %c0_i32_1 = arith.constant 0 : i32
    return %c0_i32, %c0_i32_0 : i32, i32
  }
  func.func @transform_4(%arg0: i32, %arg1: i32) -> (i32, i32) {
    %c0_i32 = arith.constant 0 : i32
    %c0_i32_0 = arith.constant 0 : i32
    %c0_i32_1 = arith.constant 0 : i32
    return %c0_i32, %c0_i32_0 : i32, i32
  }
  func.func @transform_5(%arg0: i32, %arg1: i32) -> (i32, i32) {
    %c0_i32 = arith.constant 0 : i32
    %c0_i32_0 = arith.constant 0 : i32
    %c0_i32_1 = arith.constant 0 : i32
    return %c0_i32, %c0_i32_0 : i32, i32
  }
  func.func @transform_6(%arg0: i32, %arg1: i32) -> (i32, i32) {
    %c0_i32 = arith.constant 0 : i32
    %c0_i32_0 = arith.constant 0 : i32
    return %arg0, %c0_i32 : i32, i32
  }
  func.func @transform_7(%arg0: i32, %arg1: i32) -> (i32, i32) {
    %c0_i32 = arith.constant 0 : i32
    %c0_i32_0 = arith.constant 0 : i32
    return %arg0, %c0_i32 : i32, i32
  }
}

</mosaic_0001>

<llo_original>
// kernel: _mlp_forward.1
$region0: #{_mlp_forward.1}
  #allocation0 [shape = 'u32[]', space=smem, size = 0x4, offset = 0x4, fixed_abs, tag = 'smem constant byte address 0x4 - core index']
  #allocation1 [shape = 'u32[144,128]{1,0:T(1,128)}', space=vmem, size = 0x12000, scoped, tag = 'internal scratch']
  #allocation2 [shape = 'f32[16,128]{1,0:T(8,128)}', space=vmem, size = 0x2000, scoped, tag = 'scratch operand']
  #allocation3 [shape = 'f32[16,128]{1,0:T(8,128)}', space=vmem, size = 0x2000, scoped, tag = 'scratch operand']
  %s0 = inlined_call_operand.vmem [shape: f32[16,1024], index: 0, kind: input, shape index: {}]
  %s1 = inlined_call_operand.vmem [shape: f32[16,1024], index: 1, kind: input, shape index: {}]
  %s2 = inlined_call_operand.hbm [shape: bf16[1024,128], index: 2, kind: input, shape index: {}]
  %s3 = inlined_call_operand.vmem [shape: f32[1,128], index: 3, kind: input, shape index: {}]
  %s4 = inlined_call_operand.vmem [shape: bf16[128,128], index: 4, kind: input, shape index: {}]
  %s5 = inlined_call_operand.vmem [shape: f32[1,128], index: 5, kind: input, shape index: {}]
  %s6 = inlined_call_operand.vmem [shape: bf16[16,128], index: 6, kind: output, shape index: {0}]
  %s7 = inlined_call_operand.vmem [shape: bf16[16,128], index: 7, kind: output, shape index: {1}]
  %8 = xla_tuple %s6, %s7
  %s9 = sld [smem:[#allocation0]]
  $region54: #{_mlp_forward.1} parent=0
    _
  %s11 = ssub.s32 1, %s9
  %s12 = scalar_select 0, %s11, %s9
  $region1: #{_mlp_forward.1} parent=0
    #allocation4 [shape = 'u8[262144]{0}', space=vmem, size = 0x40000, scoped, tag = 'input window, operand 2, single buffered']
    #allocation5 [shape = 's32[1]{0}', space=sflag, size = 0x4, scoped, tag = 'scoped memory for _mlp_forward.1']
    %13 = vsyncpa [#allocation5], 0
    // Predicated region
    $region2: #{_mlp_forward.1} parent=1 // pred_check
      _
    $region3: #{_mlp_forward.1} parent=1 // pred_check_branch
      %15 = sbr.rel (0) target = $region5
    $region4: #{_mlp_forward.1} parent=1 // pred_region
      _
    $region5: #{_mlp_forward.1} parent=1 // pred_fallthru
      _
    // Predicated region
    $region6: #{_mlp_forward.1} parent=1 // pred_check
      _
    $region7: #{_mlp_forward.1} parent=1 // pred_check_branch
      %17 = sbr.rel (0) target = $region9
    $region8: #{_mlp_forward.1} parent=1 // pred_region
      _
    $region9: #{_mlp_forward.1} parent=1 // pred_fallthru
      _
    // Predicated region
    $region10: #{_mlp_forward.1} parent=1 // pred_check
      _
    $region11: #{_mlp_forward.1} parent=1 // pred_check_branch
      %19 = sbr.rel (0) target = $region13
    $region12: #{_mlp_forward.1} parent=1 // pred_region
      %s21 = ssub.s32 8192, 8192
      %22 = vsyncadd [#allocation5], %s21
      %s23 = sshll.u32 [#allocation4], 4
      %s24 = int_to_ptr.vmem [resolvable:$true] %s23
      %29 = dma.hbm_to_vmem [thread:$0]  %s2, 8192, %s24, [#allocation5], 64, 64, 4
    $region13: #{_mlp_forward.1} parent=1 // pred_fallthru
      _
    // Predicated region
    $region14: #{_mlp_forward.1} parent=1 // pred_check
      _
    $region15: #{_mlp_forward.1} parent=1 // pred_check_branch
      %31 = sbr.rel (0) target = $region17
    $region16: #{_mlp_forward.1} parent=1 // pred_region
      _
    $region17: #{_mlp_forward.1} parent=1 // pred_fallthru
      _
    // Predicated region
    $region18: #{_mlp_forward.1} parent=1 // pred_check
      _
    $region19: #{_mlp_forward.1} parent=1 // pred_check_branch
      %33 = sbr.rel (0) target = $region21
    $region20: #{_mlp_forward.1} parent=1 // pred_region
      _
    $region21: #{_mlp_forward.1} parent=1 // pred_fallthru
      _
    // Predicated region
    $region22: #{_mlp_forward.1} parent=1 // pred_check
      _
    $region23: #{_mlp_forward.1} parent=1 // pred_check_branch
      %35 = sbr.rel (0) target = $region25
    $region24: #{_mlp_forward.1} parent=1 // pred_region
      _
    $region25: #{_mlp_forward.1} parent=1 // pred_fallthru
      _
    // Predicated region
    $region26: #{_mlp_forward.1} parent=1 // pred_check
      _
    $region27: #{_mlp_forward.1} parent=1 // pred_check_branch
      %37 = sbr.rel (0) target = $region29
    $region28: #{_mlp_forward.1} parent=1 // pred_region
      %38 = dma.done [#allocation5], 8192
    $region29: #{_mlp_forward.1} parent=1 // pred_fallthru
      _
    %p40 = scmp.eq.s32.totalorder 0, 0
    // Predicated region
    $region30: #{_mlp_forward.1} parent=1 // pred_check
      %p41 = pneg %p40
    $region31: #{_mlp_forward.1} parent=1 // pred_check_branch
      %43 = sbr.rel (%p41) target = $region33
    $region32: #{_mlp_forward.1} parent=1 // pred_region
      %44 = vst [vmem:[#allocation2] sm:$0xff] 0.0
      %45 = vst [vmem:[#allocation2 + $0x8] sm:$0xff] 0.0
      %46 = vst [vmem:[#allocation3] sm:$0xff] 0.0
      %47 = vst [vmem:[#allocation3 + $0x8] sm:$0xff] 0.0
    $region33: #{_mlp_forward.1} parent=1 // pred_fallthru
      _
    %v48 = vld [vmem:[#allocation4] sm:$0xf]
    %v49 = vld [vmem:[#allocation4 + $0x4] sm:$0xf]
    %v50 = vld [vmem:[#allocation4 + $0x8] sm:$0xf]
    %v51 = vld [vmem:[#allocation4 + $0xc] sm:$0xf]
    %v52 = vld [vmem:[#allocation4 + $0x10] sm:$0xf]
    %v53 = vld [vmem:[#allocation4 + $0x14] sm:$0xf]
    %v54 = vld [vmem:[#allocation4 + $0x18] sm:$0xf]
    %v55 = vld [vmem:[#allocation4 + $0x1c] sm:$0xf]
    %v56 = vld [vmem:[#allocation4 + $0x20] sm:$0xf]
    %v57 = vld [vmem:[#allocation4 + $0x24] sm:$0xf]
    %v58 = vld [vmem:[#allocation4 + $0x28] sm:$0xf]
    %v59 = vld [vmem:[#allocation4 + $0x2c] sm:$0xf]
    %v60 = vld [vmem:[#allocation4 + $0x30] sm:$0xf]
    %v61 = vld [vmem:[#allocation4 + $0x34] sm:$0xf]
    %v62 = vld [vmem:[#allocation4 + $0x38] sm:$0xf]
    %v63 = vld [vmem:[#allocation4 + $0x3c] sm:$0xf]
    %v64 = vld [vmem:[#allocation4 + $0x40] sm:$0xf]
    %v65 = vld [vmem:[#allocation4 + $0x44] sm:$0xf]
    %v66 = vld [vmem:[#allocation4 + $0x48] sm:$0xf]
    %v67 = vld [vmem:[#allocation4 + $0x4c] sm:$0xf]
    %v68 = vld [vmem:[#allocation4 + $0x50] sm:$0xf]
    %v69 = vld [vmem:[#allocation4 + $0x54] sm:$0xf]
    %v70 = vld [vmem:[#allocation4 + $0x58] sm:$0xf]
    %v71 = vld [vmem:[#allocation4 + $0x5c] sm:$0xf]
    %v72 = vld [vmem:[#allocation4 + $0x60] sm:$0xf]
    %v73 = vld [vmem:[#allocation4 + $0x64] sm:$0xf]
    %v74 = vld [vmem:[#allocation4 + $0x68] sm:$0xf]
    %v75 = vld [vmem:[#allocation4 + $0x6c] sm:$0xf]
    %v76 = vld [vmem:[#allocation4 + $0x70] sm:$0xf]
    %v77 = vld [vmem:[#allocation4 + $0x74] sm:$0xf]
    %v78 = vld [vmem:[#allocation4 + $0x78] sm:$0xf]
    %v79 = vld [vmem:[#allocation4 + $0x7c] sm:$0xf]
    %v80 = vld [vmem:[#allocation4 + $0x80] sm:$0xf]
    %v81 = vld [vmem:[#allocation4 + $0x84] sm:$0xf]
    %v82 = vld [vmem:[#allocation4 + $0x88] sm:$0xf]
    %v83 = vld [vmem:[#allocation4 + $0x8c] sm:$0xf]
    %v84 = vld [vmem:[#allocation4 + $0x90] sm:$0xf]
    %v85 = vld [vmem:[#allocation4 + $0x94] sm:$0xf]
    %v86 = vld [vmem:[#allocation4 + $0x98] sm:$0xf]
    %v87 = vld [vmem:[#allocation4 + $0x9c] sm:$0xf]
    %v88 = vld [vmem:[#allocation4 + $0xa0] sm:$0xf]
    %v89 = vld [vmem:[#allocation4 + $0xa4] sm:$0xf]
    %v90 = vld [vmem:[#allocation4 + $0xa8] sm:$0xf]
    %v91 = vld [vmem:[#allocation4 + $0xac] sm:$0xf]
    %v92 = vld [vmem:[#allocation4 + $0xb0] sm:$0xf]
    %v93 = vld [vmem:[#allocation4 + $0xb4] sm:$0xf]
    %v94 = vld [vmem:[#allocation4 + $0xb8] sm:$0xf]
    %v95 = vld [vmem:[#allocation4 + $0xbc] sm:$0xf]
    %v96 = vld [vmem:[#allocation4 + $0xc0] sm:$0xf]
    %v97 = vld [vmem:[#allocation4 + $0xc4] sm:$0xf]
    %v98 = vld [vmem:[#allocation4 + $0xc8] sm:$0xf]
    %v99 = vld [vmem:[#allocation4 + $0xcc] sm:$0xf]
    %v100 = vld [vmem:[#allocation4 + $0xd0] sm:$0xf]
    %v101 = vld [vmem:[#allocation4 + $0xd4] sm:$0xf]
    %v102 = vld [vmem:[#allocation4 + $0xd8] sm:$0xf]
    %v103 = vld [vmem:[#allocation4 + $0xdc] sm:$0xf]
    %v104 = vld [vmem:[#allocation4 + $0xe0] sm:$0xf]
    %v105 = vld [vmem:[#allocation4 + $0xe4] sm:$0xf]
    %v106 = vld [vmem:[#allocation4 + $0xe8] sm:$0xf]
    %v107 = vld [vmem:[#allocation4 + $0xec] sm:$0xf]
    %v108 = vld [vmem:[#allocation4 + $0xf0] sm:$0xf]
    %v109 = vld [vmem:[#allocation4 + $0xf4] sm:$0xf]
    %v110 = vld [vmem:[#allocation4 + $0xf8] sm:$0xf]
    %v111 = vld [vmem:[#allocation4 + $0xfc] sm:$0xf]
    %v112 = vld [vmem:[#allocation4 + $0x100] sm:$0xf]
    %v113 = vld [vmem:[#allocation4 + $0x104] sm:$0xf]
    %v114 = vld [vmem:[#allocation4 + $0x108] sm:$0xf]
    %v115 = vld [vmem:[#allocation4 + $0x10c] sm:$0xf]
    %v116 = vld [vmem:[#allocation4 + $0x110] sm:$0xf]
    %v117 = vld [vmem:[#allocation4 + $0x114] sm:$0xf]
    %v118 = vld [vmem:[#allocation4 + $0x118] sm:$0xf]
    %v119 = vld [vmem:[#allocation4 + $0x11c] sm:$0xf]
    %v120 = vld [vmem:[#allocation4 + $0x120] sm:$0xf]
    %v121 = vld [vmem:[#allocation4 + $0x124] sm:$0xf]
    %v122 = vld [vmem:[#allocation4 + $0x128] sm:$0xf]
    %v123 = vld [vmem:[#allocation4 + $0x12c] sm:$0xf]
    %v124 = vld [vmem:[#allocation4 + $0x130] sm:$0xf]
    %v125 = vld [vmem:[#allocation4 + $0x134] sm:$0xf]
    %v126 = vld [vmem:[#allocation4 + $0x138] sm:$0xf]
    %v127 = vld [vmem:[#allocation4 + $0x13c] sm:$0xf]
    %v128 = vld [vmem:[#allocation4 + $0x140] sm:$0xf]
    %v129 = vld [vmem:[#allocation4 + $0x144] sm:$0xf]
    %v130 = vld [vmem:[#allocation4 + $0x148] sm:$0xf]
    %v131 = vld [vmem:[#allocation4 + $0x14c] sm:$0xf]
    %v132 = vld [vmem:[#allocation4 + $0x150] sm:$0xf]
    %v133 = vld [vmem:[#allocation4 + $0x154] sm:$0xf]
    %v134 = vld [vmem:[#allocation4 + $0x158] sm:$0xf]
    %v135 = vld [vmem:[#allocation4 + $0x15c] sm:$0xf]
    %v136 = vld [vmem:[#allocation4 + $0x160] sm:$0xf]
    %v137 = vld [vmem:[#allocation4 + $0x164] sm:$0xf]
    %v138 = vld [vmem:[#allocation4 + $0x168] sm:$0xf]
    %v139 = vld [vmem:[#allocation4 + $0x16c] sm:$0xf]
    %v140 = vld [vmem:[#allocation4 + $0x170] sm:$0xf]
    %v141 = vld [vmem:[#allocation4 + $0x174] sm:$0xf]
    %v142 = vld [vmem:[#allocation4 + $0x178] sm:$0xf]
    %v143 = vld [vmem:[#allocation4 + $0x17c] sm:$0xf]
    %v144 = vld [vmem:[#allocation4 + $0x180] sm:$0xf]
    %v145 = vld [vmem:[#allocation4 + $0x184] sm:$0xf]
    %v146 = vld [vmem:[#allocation4 + $0x188] sm:$0xf]
    %v147 = vld [vmem:[#allocation4 + $0x18c] sm:$0xf]
    %v148 = vld [vmem:[#allocation4 + $0x190] sm:$0xf]
    %v149 = vld [vmem:[#allocation4 + $0x194] sm:$0xf]
    %v150 = vld [vmem:[#allocation4 + $0x198] sm:$0xf]
    %v151 = vld [vmem:[#allocation4 + $0x19c] sm:$0xf]
    %v152 = vld [vmem:[#allocation4 + $0x1a0] sm:$0xf]
    %v153 = vld [vmem:[#allocation4 + $0x1a4] sm:$0xf]
    %v154 = vld [vmem:[#allocation4 + $0x1a8] sm:$0xf]
    %v155 = vld [vmem:[#allocation4 + $0x1ac] sm:$0xf]
    %v156 = vld [vmem:[#allocation4 + $0x1b0] sm:$0xf]
    %v157 = vld [vmem:[#allocation4 + $0x1b4] sm:$0xf]
    %v158 = vld [vmem:[#allocation4 + $0x1b8] sm:$0xf]
    %v159 = vld [vmem:[#allocation4 + $0x1bc] sm:$0xf]
    %v160 = vld [vmem:[#allocation4 + $0x1c0] sm:$0xf]
    %v161 = vld [vmem:[#allocation4 + $0x1c4] sm:$0xf]
    %v162 = vld [vmem:[#allocation4 + $0x1c8] sm:$0xf]
    %v163 = vld [vmem:[#allocation4 + $0x1cc] sm:$0xf]
    %v164 = vld [vmem:[#allocation4 + $0x1d0] sm:$0xf]
    %v165 = vld [vmem:[#allocation4 + $0x1d4] sm:$0xf]
    %v166 = vld [vmem:[#allocation4 + $0x1d8] sm:$0xf]
    %v167 = vld [vmem:[#allocation4 + $0x1dc] sm:$0xf]
    %v168 = vld [vmem:[#allocation4 + $0x1e0] sm:$0xf]
    %v169 = vld [vmem:[#allocation4 + $0x1e4] sm:$0xf]
    %v170 = vld [vmem:[#allocation4 + $0x1e8] sm:$0xf]
    %v171 = vld [vmem:[#allocation4 + $0x1ec] sm:$0xf]
    %v172 = vld [vmem:[#allocation4 + $0x1f0] sm:$0xf]
    %v173 = vld [vmem:[#allocation4 + $0x1f4] sm:$0xf]
    %v174 = vld [vmem:[#allocation4 + $0x1f8] sm:$0xf]
    %v175 = vld [vmem:[#allocation4 + $0x1fc] sm:$0xf]
    %v176 = vld [vmem:[#allocation2] sm:$0xff]
    %v177 = vld [vmem:[#allocation2 + $0x8] sm:$0xff]
    %v178 = vld [vmem:[%s0] sm:$0xff]
    %v179 = vld [vmem:[%s0 + $0x8] sm:$0xff]
    %v180 = vld [vmem:[%s0 + $0x10] sm:$0xff]
    %v181 = vld [vmem:[%s0 + $0x18] sm:$0xff]
    %v182 = vld [vmem:[%s0 + $0x20] sm:$0xff]
    %v183 = vld [vmem:[%s0 + $0x28] sm:$0xff]
    %v184 = vld [vmem:[%s0 + $0x30] sm:$0xff]
    %v185 = vld [vmem:[%s0 + $0x38] sm:$0xff]
    %v186 = vld [vmem:[%s0 + $0x40] sm:$0xff]
    %v187 = vld [vmem:[%s0 + $0x48] sm:$0xff]
    %v188 = vld [vmem:[%s0 + $0x50] sm:$0xff]
    %v189 = vld [vmem:[%s0 + $0x58] sm:$0xff]
    %v190 = vld [vmem:[%s0 + $0x60] sm:$0xff]
    %v191 = vld [vmem:[%s0 + $0x68] sm:$0xff]
    %v192 = vld [vmem:[%s0 + $0x70] sm:$0xff]
    %v193 = vld [vmem:[%s0 + $0x78] sm:$0xff]
    %v194 = vpack.c.bf16 %v186, %v178
    %v195 = vpack.c.bf16 %v187, %v179
    %v196 = vpack.c.bf16 %v188, %v180
    %v197 = vpack.c.bf16 %v189, %v181
    %v198 = vpack.c.bf16 %v190, %v182
    %v199 = vpack.c.bf16 %v191, %v183
    %v200 = vpack.c.bf16 %v192, %v184
    %v201 = vpack.c.bf16 %v193, %v185
    %v330 = vunpack.c.l.b16 %v48
    %v331 = vunpack.c.l.b16 %v49
    %v332 = vunpack.c.l.b16 %v50
    %v333 = vunpack.c.l.b16 %v51
    %v334 = vunpack.c.l.b16 %v52
    %v335 = vunpack.c.l.b16 %v53
    %v336 = vunpack.c.l.b16 %v54
    %v337 = vunpack.c.l.b16 %v55
    %v338 = vunpack.c.l.b16 %v56
    %v339 = vunpack.c.l.b16 %v57
    %v340 = vunpack.c.l.b16 %v58
    %v341 = vunpack.c.l.b16 %v59
    %v342 = vunpack.c.l.b16 %v60
    %v343 = vunpack.c.l.b16 %v61
    %v344 = vunpack.c.l.b16 %v62
    %v345 = vunpack.c.l.b16 %v63
    %v346 = vunpack.c.l.b16 %v64
    %v347 = vunpack.c.l.b16 %v65
    %v348 = vunpack.c.l.b16 %v66
    %v349 = vunpack.c.l.b16 %v67
    %v350 = vunpack.c.l.b16 %v68
    %v351 = vunpack.c.l.b16 %v69
    %v352 = vunpack.c.l.b16 %v70
    %v353 = vunpack.c.l.b16 %v71
    %v354 = vunpack.c.l.b16 %v72
    %v355 = vunpack.c.l.b16 %v73
    %v356 = vunpack.c.l.b16 %v74
    %v357 = vunpack.c.l.b16 %v75
    %v358 = vunpack.c.l.b16 %v76
    %v359 = vunpack.c.l.b16 %v77
    %v360 = vunpack.c.l.b16 %v78
    %v361 = vunpack.c.l.b16 %v79
    %v362 = vunpack.c.l.b16 %v80
    %v363 = vunpack.c.l.b16 %v81
    %v364 = vunpack.c.l.b16 %v82
    %v365 = vunpack.c.l.b16 %v83
    %v366 = vunpack.c.l.b16 %v84
    %v367 = vunpack.c.l.b16 %v85
    %v368 = vunpack.c.l.b16 %v86
    %v369 = vunpack.c.l.b16 %v87
    %v370 = vunpack.c.l.b16 %v88
    %v371 = vunpack.c.l.b16 %v89
    %v372 = vunpack.c.l.b16 %v90
    %v373 = vunpack.c.l.b16 %v91
    %v374 = vunpack.c.l.b16 %v92
    %v375 = vunpack.c.l.b16 %v93
    %v376 = vunpack.c.l.b16 %v94
    %v377 = vunpack.c.l.b16 %v95
    %v378 = vunpack.c.l.b16 %v96
    %v379 = vunpack.c.l.b16 %v97
    %v380 = vunpack.c.l.b16 %v98
    %v381 = vunpack.c.l.b16 %v99
    %v382 = vunpack.c.l.b16 %v100
    %v383 = vunpack.c.l.b16 %v101
    %v384 = vunpack.c.l.b16 %v102
    %v385 = vunpack.c.l.b16 %v103
    %v386 = vunpack.c.l.b16 %v104
    %v387 = vunpack.c.l.b16 %v105
    %v388 = vunpack.c.l.b16 %v106
    %v389 = vunpack.c.l.b16 %v107
    %v390 = vunpack.c.l.b16 %v108
    %v391 = vunpack.c.l.b16 %v109
    %v392 = vunpack.c.l.b16 %v110
    %v393 = vunpack.c.l.b16 %v111
    %v394 = vunpack.c.l.b16 %v112
    %v395 = vunpack.c.l.b16 %v113
    %v396 = vunpack.c.l.b16 %v114
    %v397 = vunpack.c.l.b16 %v115
    %v398 = vunpack.c.l.b16 %v116
    %v399 = vunpack.c.l.b16 %v117
    %v400 = vunpack.c.l.b16 %v118
    %v401 = vunpack.c.l.b16 %v119
    %v402 = vunpack.c.l.b16 %v120
    %v403 = vunpack.c.l.b16 %v121
    %v404 = vunpack.c.l.b16 %v122
    %v405 = vunpack.c.l.b16 %v123
    %v406 = vunpack.c.l.b16 %v124
    %v407 = vunpack.c.l.b16 %v125
    %v408 = vunpack.c.l.b16 %v126
    %v409 = vunpack.c.l.b16 %v127
    %v410 = vunpack.c.l.b16 %v128
    %v411 = vunpack.c.l.b16 %v129
    %v412 = vunpack.c.l.b16 %v130
    %v413 = vunpack.c.l.b16 %v131
    %v414 = vunpack.c.l.b16 %v132
    %v415 = vunpack.c.l.b16 %v133
    %v416 = vunpack.c.l.b16 %v134
    %v417 = vunpack.c.l.b16 %v135
    %v418 = vunpack.c.l.b16 %v136
    %v419 = vunpack.c.l.b16 %v137
    %v420 = vunpack.c.l.b16 %v138
    %v421 = vunpack.c.l.b16 %v139
    %v422 = vunpack.c.l.b16 %v140
    %v423 = vunpack.c.l.b16 %v141
    %v424 = vunpack.c.l.b16 %v142
    %v425 = vunpack.c.l.b16 %v143
    %v426 = vunpack.c.l.b16 %v144
    %v427 = vunpack.c.l.b16 %v145
    %v428 = vunpack.c.l.b16 %v146
    %v429 = vunpack.c.l.b16 %v147
    %v430 = vunpack.c.l.b16 %v148
    %v431 = vunpack.c.l.b16 %v149
    %v432 = vunpack.c.l.b16 %v150
    %v433 = vunpack.c.l.b16 %v151
    %v434 = vunpack.c.l.b16 %v152
    %v435 = vunpack.c.l.b16 %v153
    %v436 = vunpack.c.l.b16 %v154
    %v437 = vunpack.c.l.b16 %v155
    %v438 = vunpack.c.l.b16 %v156
    %v439 = vunpack.c.l.b16 %v157
    %v440 = vunpack.c.l.b16 %v158
    %v441 = vunpack.c.l.b16 %v159
    %v442 = vunpack.c.l.b16 %v160
    %v443 = vunpack.c.l.b16 %v161
    %v444 = vunpack.c.l.b16 %v162
    %v445 = vunpack.c.l.b16 %v163
    %v446 = vunpack.c.l.b16 %v164
    %v447 = vunpack.c.l.b16 %v165
    %v448 = vunpack.c.l.b16 %v166
    %v449 = vunpack.c.l.b16 %v167
    %v450 = vunpack.c.l.b16 %v168
    %v451 = vunpack.c.l.b16 %v169
    %v452 = vunpack.c.l.b16 %v170
    %v453 = vunpack.c.l.b16 %v171
    %v454 = vunpack.c.l.b16 %v172
    %v455 = vunpack.c.l.b16 %v173
    %v456 = vunpack.c.l.b16 %v174
    %v457 = vunpack.c.l.b16 %v175
    %v458 = vpack.c.b16 %v331, %v330
    %v459 = vpack.c.b16 %v333, %v332
    %v460 = vpack.c.b16 %v335, %v334
    %v461 = vpack.c.b16 %v337, %v336
    %v462 = vpack.c.b16 %v339, %v338
    %v463 = vpack.c.b16 %v341, %v340
    %v464 = vpack.c.b16 %v343, %v342
    %v465 = vpack.c.b16 %v345, %v344
    %v466 = vpack.c.b16 %v347, %v346
    %v467 = vpack.c.b16 %v349, %v348
    %v468 = vpack.c.b16 %v351, %v350
    %v469 = vpack.c.b16 %v353, %v352
    %v470 = vpack.c.b16 %v355, %v354
    %v471 = vpack.c.b16 %v357, %v356
    %v472 = vpack.c.b16 %v359, %v358
    %v473 = vpack.c.b16 %v361, %v360
    %v474 = vpack.c.b16 %v363, %v362
    %v475 = vpack.c.b16 %v365, %v364
    %v476 = vpack.c.b16 %v367, %v366
    %v477 = vpack.c.b16 %v369, %v368
    %v478 = vpack.c.b16 %v371, %v370
    %v479 = vpack.c.b16 %v373, %v372
    %v480 = vpack.c.b16 %v375, %v374
    %v481 = vpack.c.b16 %v377, %v376
    %v482 = vpack.c.b16 %v379, %v378
    %v483 = vpack.c.b16 %v381, %v380
    %v484 = vpack.c.b16 %v383, %v382
    %v485 = vpack.c.b16 %v385, %v384
    %v486 = vpack.c.b16 %v387, %v386
    %v487 = vpack.c.b16 %v389, %v388
    %v488 = vpack.c.b16 %v391, %v390
    %v489 = vpack.c.b16 %v393, %v392
    %v490 = vpack.c.b16 %v395, %v394
    %v491 = vpack.c.b16 %v397, %v396
    %v492 = vpack.c.b16 %v399, %v398
    %v493 = vpack.c.b16 %v401, %v400
    %v494 = vpack.c.b16 %v403, %v402
    %v495 = vpack.c.b16 %v405, %v404
    %v496 = vpack.c.b16 %v407, %v406
    %v497 = vpack.c.b16 %v409, %v408
    %v498 = vpack.c.b16 %v411, %v410
    %v499 = vpack.c.b16 %v413, %v412
    %v500 = vpack.c.b16 %v415, %v414
    %v501 = vpack.c.b16 %v417, %v416
    %v502 = vpack.c.b16 %v419, %v418
    %v503 = vpack.c.b16 %v421, %v420
    %v504 = vpack.c.b16 %v423, %v422
    %v505 = vpack.c.b16 %v425, %v424
    %v506 = vpack.c.b16 %v427, %v426
    %v507 = vpack.c.b16 %v429, %v428
    %v508 = vpack.c.b16 %v431, %v430
    %v509 = vpack.c.b16 %v433, %v432
    %v510 = vpack.c.b16 %v435, %v434
    %v511 = vpack.c.b16 %v437, %v436
    %v512 = vpack.c.b16 %v439, %v438
    %v513 = vpack.c.b16 %v441, %v440
    %v514 = vpack.c.b16 %v443, %v442
    %v515 = vpack.c.b16 %v445, %v444
    %v516 = vpack.c.b16 %v447, %v446
    %v517 = vpack.c.b16 %v449, %v448
    %v518 = vpack.c.b16 %v451, %v450
    %v519 = vpack.c.b16 %v453, %v452
    %v520 = vpack.c.b16 %v455, %v454
    %v521 = vpack.c.b16 %v457, %v456
    %586 = vmatprep.subr.bf16.mxu0 0
    %587 = vmatpush1.bf16.msra.mxu0 %v458
    %588 = vmatprep.subr.bf16.mxu0 0
    %589 = vmatpush1.bf16.msra.mxu0 %v459
    %590 = vmatprep.subr.bf16.mxu0 0
    %591 = vmatpush1.bf16.msra.mxu0 %v460
    %592 = vmatprep.subr.bf16.mxu0 0
    %593 = vmatpush1.bf16.msra.mxu0 %v461
    %594 = vmatprep.subr.bf16.mxu0 0
    %595 = vmatpush1.bf16.msra.mxu0 %v462
    %596 = vmatprep.subr.bf16.mxu0 0
    %597 = vmatpush1.bf16.msra.mxu0 %v463
    %598 = vmatprep.subr.bf16.mxu0 0
    %599 = vmatpush1.bf16.msra.mxu0 %v464
    %600 = vmatprep.subr.bf16.mxu0 0
    %601 = vmatpush1.bf16.msra.mxu0 %v465
    %602 = vmatprep.subr.bf16.mxu0 0
    %603 = vmatpush1.bf16.msra.mxu0 %v466
    %604 = vmatprep.subr.bf16.mxu0 0
    %605 = vmatpush1.bf16.msra.mxu0 %v467
    %606 = vmatprep.subr.bf16.mxu0 0
    %607 = vmatpush1.bf16.msra.mxu0 %v468
    %608 = vmatprep.subr.bf16.mxu0 0
    %609 = vmatpush1.bf16.msra.mxu0 %v469
    %610 = vmatprep.subr.bf16.mxu0 0
    %611 = vmatpush1.bf16.msra.mxu0 %v470
    %612 = vmatprep.subr.bf16.mxu0 0
    %613 = vmatpush1.bf16.msra.mxu0 %v471
    %614 = vmatprep.subr.bf16.mxu0 0
    %615 = vmatpush1.bf16.msra.mxu0 %v472
    %616 = vmatprep.subr.bf16.mxu0 0
    %617 = vmatpush1.bf16.msra.mxu0 %v473
    %618 = vmatprep.mubr.bf16.mxu0 %v195
    %619 = vmatmul.mubr.bf16.gmra.mrb[0].mxu0 %v194
    %v620 = vpop.f32.mrb[0].mxu0
    %v621 = vadd.f32 0.0, %v620
    %v622 = vpop.f32.mrb[0].mxu0
    %v623 = vpop.f32.mrb[0].mxu0
    %v624 = vadd.f32 0.0, %v623
    %v625 = vpop.f32.mrb[0].mxu0
    %626 = vdwg.mxu0
    %627 = vmatprep.subr.bf16.mxu0 0
    %628 = vmatpush1.bf16.msra.mxu0 %v474
    %629 = vmatprep.subr.bf16.mxu0 0
    %630 = vmatpush1.bf16.msra.mxu0 %v475
    %631 = vmatprep.subr.bf16.mxu0 0
    %632 = vmatpush1.bf16.msra.mxu0 %v476
    %633 = vmatprep.subr.bf16.mxu0 0
    %634 = vmatpush1.bf16.msra.mxu0 %v477
    %635 = vmatprep.subr.bf16.mxu0 0
    %636 = vmatpush1.bf16.msra.mxu0 %v478
    %637 = vmatprep.subr.bf16.mxu0 0
    %638 = vmatpush1.bf16.msra.mxu0 %v479
    %639 = vmatprep.subr.bf16.mxu0 0
    %640 = vmatpush1.bf16.msra.mxu0 %v480
    %641 = vmatprep.subr.bf16.mxu0 0
    %642 = vmatpush1.bf16.msra.mxu0 %v481
    %643 = vmatprep.subr.bf16.mxu0 0
    %644 = vmatpush1.bf16.msra.mxu0 %v482
    %645 = vmatprep.subr.bf16.mxu0 0
    %646 = vmatpush1.bf16.msra.mxu0 %v483
    %647 = vmatprep.subr.bf16.mxu0 0
    %648 = vmatpush1.bf16.msra.mxu0 %v484
    %649 = vmatprep.subr.bf16.mxu0 0
    %650 = vmatpush1.bf16.msra.mxu0 %v485
    %651 = vmatprep.subr.bf16.mxu0 0
    %652 = vmatpush1.bf16.msra.mxu0 %v486
    %653 = vmatprep.subr.bf16.mxu0 0
    %654 = vmatpush1.bf16.msra.mxu0 %v487
    %655 = vmatprep.subr.bf16.mxu0 0
    %656 = vmatpush1.bf16.msra.mxu0 %v488
    %657 = vmatprep.subr.bf16.mxu0 0
    %658 = vmatpush1.bf16.msra.mxu0 %v489
    %659 = vmatprep.mubr.bf16.mxu0 %v197
    %660 = vmatmul.mubr.bf16.gmra.mrb[0].mxu0 %v196
    %v661 = vpop.f32.mrb[0].mxu0
    %v662 = vadd.f32 %v621, %v661
    %v663 = vpop.f32.mrb[0].mxu0
    %v664 = vpop.f32.mrb[0].mxu0
    %v665 = vadd.f32 %v624, %v664
    %v666 = vpop.f32.mrb[0].mxu0
    %667 = vdwg.mxu0
    %668 = vmatprep.subr.bf16.mxu0 0
    %669 = vmatpush1.bf16.msra.mxu0 %v490
    %670 = vmatprep.subr.bf16.mxu0 0
    %671 = vmatpush1.bf16.msra.mxu0 %v491
    %672 = vmatprep.subr.bf16.mxu0 0
    %673 = vmatpush1.bf16.msra.mxu0 %v492
    %674 = vmatprep.subr.bf16.mxu0 0
    %675 = vmatpush1.bf16.msra.mxu0 %v493
    %676 = vmatprep.subr.bf16.mxu0 0
    %677 = vmatpush1.bf16.msra.mxu0 %v494
    %678 = vmatprep.subr.bf16.mxu0 0
    %679 = vmatpush1.bf16.msra.mxu0 %v495
    %680 = vmatprep.subr.bf16.mxu0 0
    %681 = vmatpush1.bf16.msra.mxu0 %v496
    %682 = vmatprep.subr.bf16.mxu0 0
    %683 = vmatpush1.bf16.msra.mxu0 %v497
    %684 = vmatprep.subr.bf16.mxu0 0
    %685 = vmatpush1.bf16.msra.mxu0 %v498
    %686 = vmatprep.subr.bf16.mxu0 0
    %687 = vmatpush1.bf16.msra.mxu0 %v499
    %688 = vmatprep.subr.bf16.mxu0 0
    %689 = vmatpush1.bf16.msra.mxu0 %v500
    %690 = vmatprep.subr.bf16.mxu0 0
    %691 = vmatpush1.bf16.msra.mxu0 %v501
    %692 = vmatprep.subr.bf16.mxu0 0
    %693 = vmatpush1.bf16.msra.mxu0 %v502
    %694 = vmatprep.subr.bf16.mxu0 0
    %695 = vmatpush1.bf16.msra.mxu0 %v503
    %696 = vmatprep.subr.bf16.mxu0 0
    %697 = vmatpush1.bf16.msra.mxu0 %v504
    %698 = vmatprep.subr.bf16.mxu0 0
    %699 = vmatpush1.bf16.msra.mxu0 %v505
    %700 = vmatprep.mubr.bf16.mxu0 %v199
    %701 = vmatmul.mubr.bf16.gmra.mrb[0].mxu0 %v198
    %v702 = vpop.f32.mrb[0].mxu0
    %v703 = vadd.f32 %v662, %v702
    %v704 = vpop.f32.mrb[0].mxu0
    %v705 = vpop.f32.mrb[0].mxu0
    %v706 = vadd.f32 %v665, %v705
    %v707 = vpop.f32.mrb[0].mxu0
    %708 = vdwg.mxu0
    %709 = vmatprep.subr.bf16.mxu0 0
    %710 = vmatpush1.bf16.msra.mxu0 %v506
    %711 = vmatprep.subr.bf16.mxu0 0
    %712 = vmatpush1.bf16.msra.mxu0 %v507
    %713 = vmatprep.subr.bf16.mxu0 0
    %714 = vmatpush1.bf16.msra.mxu0 %v508
    %715 = vmatprep.subr.bf16.mxu0 0
    %716 = vmatpush1.bf16.msra.mxu0 %v509
    %717 = vmatprep.subr.bf16.mxu0 0
    %718 = vmatpush1.bf16.msra.mxu0 %v510
    %719 = vmatprep.subr.bf16.mxu0 0
    %720 = vmatpush1.bf16.msra.mxu0 %v511
    %721 = vmatprep.subr.bf16.mxu0 0
    %722 = vmatpush1.bf16.msra.mxu0 %v512
    %723 = vmatprep.subr.bf16.mxu0 0
    %724 = vmatpush1.bf16.msra.mxu0 %v513
    %725 = vmatprep.subr.bf16.mxu0 0
    %726 = vmatpush1.bf16.msra.mxu0 %v514
    %727 = vmatprep.subr.bf16.mxu0 0
    %728 = vmatpush1.bf16.msra.mxu0 %v515
    %729 = vmatprep.subr.bf16.mxu0 0
    %730 = vmatpush1.bf16.msra.mxu0 %v516
    %731 = vmatprep.subr.bf16.mxu0 0
    %732 = vmatpush1.bf16.msra.mxu0 %v517
    %733 = vmatprep.subr.bf16.mxu0 0
    %734 = vmatpush1.bf16.msra.mxu0 %v518
    %735 = vmatprep.subr.bf16.mxu0 0
    %736 = vmatpush1.bf16.msra.mxu0 %v519
    %737 = vmatprep.subr.bf16.mxu0 0
    %738 = vmatpush1.bf16.msra.mxu0 %v520
    %739 = vmatprep.subr.bf16.mxu0 0
    %740 = vmatpush1.bf16.msra.mxu0 %v521
    %741 = vmatprep.mubr.bf16.mxu0 %v201
    %742 = vmatmul.mubr.bf16.gmra.mrb[0].mxu0 %v200
    %v743 = vpop.f32.mrb[0].mxu0
    %v744 = vadd.f32 %v703, %v743
    %v745 = vpop.f32.mrb[0].mxu0
    %v746 = vpop.f32.mrb[0].mxu0
    %v747 = vadd.f32 %v706, %v746
    %v748 = vpop.f32.mrb[0].mxu0
    %749 = vdwg.mxu0
    %v750 = vadd.f32 %v176, %v744
    %v751 = vadd.f32 %v177, %v747
    %752 = vst [vmem:[#allocation2] sm:$0xff] %v750
    %753 = vst [vmem:[#allocation2 + $0x8] sm:$0xff] %v751
    %v754 = vld [vmem:[#allocation3] sm:$0xff]
    %v755 = vld [vmem:[#allocation3 + $0x8] sm:$0xff]
    %v756 = vld [vmem:[%s1] sm:$0xff]
    %v757 = vld [vmem:[%s1 + $0x8] sm:$0xff]
    %v758 = vld [vmem:[%s1 + $0x10] sm:$0xff]
    %v759 = vld [vmem:[%s1 + $0x18] sm:$0xff]
    %v760 = vld [vmem:[%s1 + $0x20] sm:$0xff]
    %v761 = vld [vmem:[%s1 + $0x28] sm:$0xff]
    %v762 = vld [vmem:[%s1 + $0x30] sm:$0xff]
    %v763 = vld [vmem:[%s1 + $0x38] sm:$0xff]
    %v764 = vld [vmem:[%s1 + $0x40] sm:$0xff]
    %v765 = vld [vmem:[%s1 + $0x48] sm:$0xff]
    %v766 = vld [vmem:[%s1 + $0x50] sm:$0xff]
    %v767 = vld [vmem:[%s1 + $0x58] sm:$0xff]
    %v768 = vld [vmem:[%s1 + $0x60] sm:$0xff]
    %v769 = vld [vmem:[%s1 + $0x68] sm:$0xff]
    %v770 = vld [vmem:[%s1 + $0x70] sm:$0xff]
    %v771 = vld [vmem:[%s1 + $0x78] sm:$0xff]
    %v772 = vpack.c.bf16 %v764, %v756
    %v773 = vpack.c.bf16 %v765, %v757
    %v774 = vpack.c.bf16 %v766, %v758
    %v775 = vpack.c.bf16 %v767, %v759
    %v776 = vpack.c.bf16 %v768, %v760
    %v777 = vpack.c.bf16 %v769, %v761
    %v778 = vpack.c.bf16 %v770, %v762
    %v779 = vpack.c.bf16 %v771, %v763
    %780 = vmatprep.subr.bf16.mxu0 0
    %781 = vmatpush1.bf16.msra.mxu0 %v458
    %782 = vmatprep.subr.bf16.mxu0 0
    %783 = vmatpush1.bf16.msra.mxu0 %v459
    %784 = vmatprep.subr.bf16.mxu0 0
    %785 = vmatpush1.bf16.msra.mxu0 %v460
    %786 = vmatprep.subr.bf16.mxu0 0
    %787 = vmatpush1.bf16.msra.mxu0 %v461
    %788 = vmatprep.subr.bf16.mxu0 0
    %789 = vmatpush1.bf16.msra.mxu0 %v462
    %790 = vmatprep.subr.bf16.mxu0 0
    %791 = vmatpush1.bf16.msra.mxu0 %v463
    %792 = vmatprep.subr.bf16.mxu0 0
    %793 = vmatpush1.bf16.msra.mxu0 %v464
    %794 = vmatprep.subr.bf16.mxu0 0
    %795 = vmatpush1.bf16.msra.mxu0 %v465
    %796 = vmatprep.subr.bf16.mxu0 0
    %797 = vmatpush1.bf16.msra.mxu0 %v466
    %798 = vmatprep.subr.bf16.mxu0 0
    %799 = vmatpush1.bf16.msra.mxu0 %v467
    %800 = vmatprep.subr.bf16.mxu0 0
    %801 = vmatpush1.bf16.msra.mxu0 %v468
    %802 = vmatprep.subr.bf16.mxu0 0
    %803 = vmatpush1.bf16.msra.mxu0 %v469
    %804 = vmatprep.subr.bf16.mxu0 0
    %805 = vmatpush1.bf16.msra.mxu0 %v470
    %806 = vmatprep.subr.bf16.mxu0 0
    %807 = vmatpush1.bf16.msra.mxu0 %v471
    %808 = vmatprep.subr.bf16.mxu0 0
    %809 = vmatpush1.bf16.msra.mxu0 %v472
    %810 = vmatprep.subr.bf16.mxu0 0
    %811 = vmatpush1.bf16.msra.mxu0 %v473
    %812 = vmatprep.mubr.bf16.mxu0 %v773
    %813 = vmatmul.mubr.bf16.gmra.mrb[0].mxu0 %v772
    %v814 = vpop.f32.mrb[0].mxu0
    %v815 = vadd.f32 0.0, %v814
    %v816 = vpop.f32.mrb[0].mxu0
    %v817 = vpop.f32.mrb[0].mxu0
    %v818 = vadd.f32 0.0, %v817
    %v819 = vpop.f32.mrb[0].mxu0
    %820 = vdwg.mxu0
    %821 = vmatprep.subr.bf16.mxu0 0
    %822 = vmatpush1.bf16.msra.mxu0 %v474
    %823 = vmatprep.subr.bf16.mxu0 0
    %824 = vmatpush1.bf16.msra.mxu0 %v475
    %825 = vmatprep.subr.bf16.mxu0 0
    %826 = vmatpush1.bf16.msra.mxu0 %v476
    %827 = vmatprep.subr.bf16.mxu0 0
    %828 = vmatpush1.bf16.msra.mxu0 %v477
    %829 = vmatprep.subr.bf16.mxu0 0
    %830 = vmatpush1.bf16.msra.mxu0 %v478
    %831 = vmatprep.subr.bf16.mxu0 0
    %832 = vmatpush1.bf16.msra.mxu0 %v479
    %833 = vmatprep.subr.bf16.mxu0 0
    %834 = vmatpush1.bf16.msra.mxu0 %v480
    %835 = vmatprep.subr.bf16.mxu0 0
    %836 = vmatpush1.bf16.msra.mxu0 %v481
    %837 = vmatprep.subr.bf16.mxu0 0
    %838 = vmatpush1.bf16.msra.mxu0 %v482
    %839 = vmatprep.subr.bf16.mxu0 0
    %840 = vmatpush1.bf16.msra.mxu0 %v483
    %841 = vmatprep.subr.bf16.mxu0 0
    %842 = vmatpush1.bf16.msra.mxu0 %v484
    %843 = vmatprep.subr.bf16.mxu0 0
    %844 = vmatpush1.bf16.msra.mxu0 %v485
    %845 = vmatprep.subr.bf16.mxu0 0
    %846 = vmatpush1.bf16.msra.mxu0 %v486
    %847 = vmatprep.subr.bf16.mxu0 0
    %848 = vmatpush1.bf16.msra.mxu0 %v487
    %849 = vmatprep.subr.bf16.mxu0 0
    %850 = vmatpush1.bf16.msra.mxu0 %v488
    %851 = vmatprep.subr.bf16.mxu0 0
    %852 = vmatpush1.bf16.msra.mxu0 %v489
    %853 = vmatprep.mubr.bf16.mxu0 %v775
    %854 = vmatmul.mubr.bf16.gmra.mrb[0].mxu0 %v774
    %v855 = vpop.f32.mrb[0].mxu0
    %v856 = vadd.f32 %v815, %v855
    %v857 = vpop.f32.mrb[0].mxu0
    %v858 = vpop.f32.mrb[0].mxu0
    %v859 = vadd.f32 %v818, %v858
    %v860 = vpop.f32.mrb[0].mxu0
    %861 = vdwg.mxu0
    %862 = vmatprep.subr.bf16.mxu0 0
    %863 = vmatpush1.bf16.msra.mxu0 %v490
    %864 = vmatprep.subr.bf16.mxu0 0
    %865 = vmatpush1.bf16.msra.mxu0 %v491
    %866 = vmatprep.subr.bf16.mxu0 0
    %867 = vmatpush1.bf16.msra.mxu0 %v492
    %868 = vmatprep.subr.bf16.mxu0 0
    %869 = vmatpush1.bf16.msra.mxu0 %v493
    %870 = vmatprep.subr.bf16.mxu0 0
    %871 = vmatpush1.bf16.msra.mxu0 %v494
    %872 = vmatprep.subr.bf16.mxu0 0
    %873 = vmatpush1.bf16.msra.mxu0 %v495
    %874 = vmatprep.subr.bf16.mxu0 0
    %875 = vmatpush1.bf16.msra.mxu0 %v496
    %876 = vmatprep.subr.bf16.mxu0 0
    %877 = vmatpush1.bf16.msra.mxu0 %v497
    %878 = vmatprep.subr.bf16.mxu0 0
    %879 = vmatpush1.bf16.msra.mxu0 %v498
    %880 = vmatprep.subr.bf16.mxu0 0
    %881 = vmatpush1.bf16.msra.mxu0 %v499
    %882 = vmatprep.subr.bf16.mxu0 0
    %883 = vmatpush1.bf16.msra.mxu0 %v500
    %884 = vmatprep.subr.bf16.mxu0 0
    %885 = vmatpush1.bf16.msra.mxu0 %v501
    %886 = vmatprep.subr.bf16.mxu0 0
    %887 = vmatpush1.bf16.msra.mxu0 %v502
    %888 = vmatprep.subr.bf16.mxu0 0
    %889 = vmatpush1.bf16.msra.mxu0 %v503
    %890 = vmatprep.subr.bf16.mxu0 0
    %891 = vmatpush1.bf16.msra.mxu0 %v504
    %892 = vmatprep.subr.bf16.mxu0 0
    %893 = vmatpush1.bf16.msra.mxu0 %v505
    %894 = vmatprep.mubr.bf16.mxu0 %v777
    %895 = vmatmul.mubr.bf16.gmra.mrb[0].mxu0 %v776
    %v896 = vpop.f32.mrb[0].mxu0
    %v897 = vadd.f32 %v856, %v896
    %v898 = vpop.f32.mrb[0].mxu0
    %v899 = vpop.f32.mrb[0].mxu0
    %v900 = vadd.f32 %v859, %v899
    %v901 = vpop.f32.mrb[0].mxu0
    %902 = vdwg.mxu0
    %903 = vmatprep.subr.bf16.mxu0 0
    %904 = vmatpush1.bf16.msra.mxu0 %v506
    %905 = vmatprep.subr.bf16.mxu0 0
    %906 = vmatpush1.bf16.msra.mxu0 %v507
    %907 = vmatprep.subr.bf16.mxu0 0
    %908 = vmatpush1.bf16.msra.mxu0 %v508
    %909 = vmatprep.subr.bf16.mxu0 0
    %910 = vmatpush1.bf16.msra.mxu0 %v509
    %911 = vmatprep.subr.bf16.mxu0 0
    %912 = vmatpush1.bf16.msra.mxu0 %v510
    %913 = vmatprep.subr.bf16.mxu0 0
    %914 = vmatpush1.bf16.msra.mxu0 %v511
    %915 = vmatprep.subr.bf16.mxu0 0
    %916 = vmatpush1.bf16.msra.mxu0 %v512
    %917 = vmatprep.subr.bf16.mxu0 0
    %918 = vmatpush1.bf16.msra.mxu0 %v513
    %919 = vmatprep.subr.bf16.mxu0 0
    %920 = vmatpush1.bf16.msra.mxu0 %v514
    %921 = vmatprep.subr.bf16.mxu0 0
    %922 = vmatpush1.bf16.msra.mxu0 %v515
    %923 = vmatprep.subr.bf16.mxu0 0
    %924 = vmatpush1.bf16.msra.mxu0 %v516
    %925 = vmatprep.subr.bf16.mxu0 0
    %926 = vmatpush1.bf16.msra.mxu0 %v517
    %927 = vmatprep.subr.bf16.mxu0 0
    %928 = vmatpush1.bf16.msra.mxu0 %v518
    %929 = vmatprep.subr.bf16.mxu0 0
    %930 = vmatpush1.bf16.msra.mxu0 %v519
    %931 = vmatprep.subr.bf16.mxu0 0
    %932 = vmatpush1.bf16.msra.mxu0 %v520
    %933 = vmatprep.subr.bf16.mxu0 0
    %934 = vmatpush1.bf16.msra.mxu0 %v521
    %935 = vmatprep.mubr.bf16.mxu0 %v779
    %936 = vmatmul.mubr.bf16.gmra.mrb[0].mxu0 %v778
    %v937 = vpop.f32.mrb[0].mxu0
    %v938 = vadd.f32 %v897, %v937
    %v939 = vpop.f32.mrb[0].mxu0
    %v940 = vpop.f32.mrb[0].mxu0
    %v941 = vadd.f32 %v900, %v940
    %v942 = vpop.f32.mrb[0].mxu0
    %943 = vdwg.mxu0
    %v944 = vadd.f32 %v754, %v938
    %v945 = vadd.f32 %v755, %v941
    %946 = vst [vmem:[#allocation3] sm:$0xff] %v944
    %947 = vst [vmem:[#allocation3 + $0x8] sm:$0xff] %v945
    // Predicated region
    $region34: #{_mlp_forward.1} parent=1 // pred_check
      %p948 = pneg %p40
    $region35: #{_mlp_forward.1} parent=1 // pred_check_branch
      %950 = sbr.rel (%p948) target = $region37
    $region36: #{_mlp_forward.1} parent=1 // pred_region
      %v951 = vld [vmem:[%s3] sm:$0x1]
      %v952 = vld [vmem:[%s4] sm:$0xf]
      %v953 = vld [vmem:[%s4 + $0x4] sm:$0xf]
      %v954 = vld [vmem:[%s4 + $0x8] sm:$0xf]
      %v955 = vld [vmem:[%s4 + $0xc] sm:$0xf]
      %v956 = vld [vmem:[%s4 + $0x10] sm:$0xf]
      %v957 = vld [vmem:[%s4 + $0x14] sm:$0xf]
      %v958 = vld [vmem:[%s4 + $0x18] sm:$0xf]
      %v959 = vld [vmem:[%s4 + $0x1c] sm:$0xf]
      %v960 = vld [vmem:[%s4 + $0x20] sm:$0xf]
      %v961 = vld [vmem:[%s4 + $0x24] sm:$0xf]
      %v962 = vld [vmem:[%s4 + $0x28] sm:$0xf]
      %v963 = vld [vmem:[%s4 + $0x2c] sm:$0xf]
      %v964 = vld [vmem:[%s4 + $0x30] sm:$0xf]
      %v965 = vld [vmem:[%s4 + $0x34] sm:$0xf]
      %v966 = vld [vmem:[%s4 + $0x38] sm:$0xf]
      %v967 = vld [vmem:[%s4 + $0x3c] sm:$0xf]
      %v968 = vld [vmem:[%s5] sm:$0x1]
      %v969 = vld [vmem:[#allocation2] sm:$0xff]
      %v970 = vld [vmem:[#allocation2 + $0x8] sm:$0xff]
      %v972 = vlaneseq
      %v973 = vshrl.u32 %v972, 7
      %v974 = vsub.s32 0, %v973
      %v975 = vrot.slane %v951, %v974
      %v977 = vadd.f32 %v969, %v975
      %v978 = vadd.f32 %v970, %v975
      %v979 = vmax.f32 %v977, 0.0
      %v980 = vmax.f32 %v978, 0.0
      %v981 = vpack.c.bf16 %v980, %v979
      %v983 = vlaneseq
      %v984 = vshrl.u32 %v983, 7
      %v985 = vsub.s32 0, %v984
      %v986 = vrot.slane %v968, %v985
      %v1004 = vunpack.c.l.b16 %v952
      %v1005 = vunpack.c.l.b16 %v953
      %v1006 = vunpack.c.l.b16 %v954
      %v1007 = vunpack.c.l.b16 %v955
      %v1008 = vunpack.c.l.b16 %v956
      %v1009 = vunpack.c.l.b16 %v957
      %v1010 = vunpack.c.l.b16 %v958
      %v1011 = vunpack.c.l.b16 %v959
      %v1012 = vunpack.c.l.b16 %v960
      %v1013 = vunpack.c.l.b16 %v961
      %v1014 = vunpack.c.l.b16 %v962
      %v1015 = vunpack.c.l.b16 %v963
      %v1016 = vunpack.c.l.b16 %v964
      %v1017 = vunpack.c.l.b16 %v965
      %v1018 = vunpack.c.l.b16 %v966
      %v1019 = vunpack.c.l.b16 %v967
      %v1020 = vpack.c.b16 %v1005, %v1004
      %v1021 = vpack.c.b16 %v1007, %v1006
      %v1022 = vpack.c.b16 %v1009, %v1008
      %v1023 = vpack.c.b16 %v1011, %v1010
      %v1024 = vpack.c.b16 %v1013, %v1012
      %v1025 = vpack.c.b16 %v1015, %v1014
      %v1026 = vpack.c.b16 %v1017, %v1016
      %v1027 = vpack.c.b16 %v1019, %v1018
      %1036 = vmatprep.subr.bf16.mxu0 0
      %1037 = vmatpush1.bf16.msra.mxu0 %v1020
      %1038 = vmatprep.subr.bf16.mxu0 0
      %1039 = vmatpush1.bf16.msra.mxu0 %v1021
      %1040 = vmatprep.subr.bf16.mxu0 0
      %1041 = vmatpush1.bf16.msra.mxu0 %v1022
      %1042 = vmatprep.subr.bf16.mxu0 0
      %1043 = vmatpush1.bf16.msra.mxu0 %v1023
      %1044 = vmatprep.subr.bf16.mxu0 0
      %1045 = vmatpush1.bf16.msra.mxu0 %v1024
      %1046 = vmatprep.subr.bf16.mxu0 0
      %1047 = vmatpush1.bf16.msra.mxu0 %v1025
      %1048 = vmatprep.subr.bf16.mxu0 0
      %1049 = vmatpush1.bf16.msra.mxu0 %v1026
      %1050 = vmatprep.subr.bf16.mxu0 0
      %1051 = vmatpush1.bf16.msra.mxu0 %v1027
      %1052 = vmatprep.subr.bf16.mxu0 0
      %1053 = vmatpush1.bf16.msra.mxu0 0
      %1054 = vmatprep.subr.bf16.mxu0 0
      %1055 = vmatpush1.bf16.msra.mxu0 0
      %1056 = vmatprep.subr.bf16.mxu0 0
      %1057 = vmatpush1.bf16.msra.mxu0 0
      %1058 = vmatprep.subr.bf16.mxu0 0
      %1059 = vmatpush1.bf16.msra.mxu0 0
      %1060 = vmatprep.subr.bf16.mxu0 0
      %1061 = vmatpush1.bf16.msra.mxu0 0
      %1062 = vmatprep.subr.bf16.mxu0 0
      %1063 = vmatpush1.bf16.msra.mxu0 0
      %1064 = vmatprep.subr.bf16.mxu0 0
      %1065 = vmatpush1.bf16.msra.mxu0 0
      %1066 = vmatprep.subr.bf16.mxu0 0
      %1067 = vmatpush1.bf16.msra.mxu0 0
      %1068 = vmatprep.mubr.bf16.mxu0 0
      %1069 = vmatmul.mubr.bf16.gmra.mrb[0].mxu0 %v981
      %v1070 = vpop.f32.mrb[0].mxu0
      %v1071 = vadd.f32 %v986, %v1070
      %v1072 = vpop.f32.mrb[0].mxu0
      %v1073 = vpop.f32.mrb[0].mxu0
      %v1074 = vadd.f32 %v986, %v1073
      %v1075 = vpop.f32.mrb[0].mxu0
      %1076 = vdwg.mxu0
      %v1077 = vpack.c.bf16 %v1074, %v1071
      %v1079 = vunpack.c.l.b16 %v1077
      %v1080 = vunpack.c.h.b16 %v1077
      %v1081 = vpack.c.b16 %v1079, %v1079
      %v1082 = vpack.c.b16 %v1080, %v1080
      %1085 = vst [vmem:[%s6] sm:$0xf] %v1081
      %1086 = vst [vmem:[%s6 + $0x4] sm:$0xf] %v1082
      %v1087 = vld [vmem:[#allocation3] sm:$0xff]
      %v1088 = vld [vmem:[#allocation3 + $0x8] sm:$0xff]
      %v1089 = vadd.f32 %v1087, %v975
      %v1090 = vadd.f32 %v1088, %v975
      %v1091 = vmax.f32 %v1089, 0.0
      %v1092 = vmax.f32 %v1090, 0.0
      %v1093 = vpack.c.bf16 %v1092, %v1091
      %1094 = vmatprep.subr.bf16.mxu0 0
      %1095 = vmatpush1.bf16.msra.mxu0 %v1020
      %1096 = vmatprep.subr.bf16.mxu0 0
      %1097 = vmatpush1.bf16.msra.mxu0 %v1021
      %1098 = vmatprep.subr.bf16.mxu0 0
      %1099 = vmatpush1.bf16.msra.mxu0 %v1022
      %1100 = vmatprep.subr.bf16.mxu0 0
      %1101 = vmatpush1.bf16.msra.mxu0 %v1023
      %1102 = vmatprep.subr.bf16.mxu0 0
      %1103 = vmatpush1.bf16.msra.mxu0 %v1024
      %1104 = vmatprep.subr.bf16.mxu0 0
      %1105 = vmatpush1.bf16.msra.mxu0 %v1025
      %1106 = vmatprep.subr.bf16.mxu0 0
      %1107 = vmatpush1.bf16.msra.mxu0 %v1026
      %1108 = vmatprep.subr.bf16.mxu0 0
      %1109 = vmatpush1.bf16.msra.mxu0 %v1027
      %1110 = vmatprep.subr.bf16.mxu0 0
      %1111 = vmatpush1.bf16.msra.mxu0 0
      %1112 = vmatprep.subr.bf16.mxu0 0
      %1113 = vmatpush1.bf16.msra.mxu0 0
      %1114 = vmatprep.subr.bf16.mxu0 0
      %1115 = vmatpush1.bf16.msra.mxu0 0
      %1116 = vmatprep.subr.bf16.mxu0 0
      %1117 = vmatpush1.bf16.msra.mxu0 0
      %1118 = vmatprep.subr.bf16.mxu0 0
      %1119 = vmatpush1.bf16.msra.mxu0 0
      %1120 = vmatprep.subr.bf16.mxu0 0
      %1121 = vmatpush1.bf16.msra.mxu0 0
      %1122 = vmatprep.subr.bf16.mxu0 0
      %1123 = vmatpush1.bf16.msra.mxu0 0
      %1124 = vmatprep.subr.bf16.mxu0 0
      %1125 = vmatpush1.bf16.msra.mxu0 0
      %1126 = vmatprep.mubr.bf16.mxu0 0
      %1127 = vmatmul.mubr.bf16.gmra.mrb[0].mxu0 %v1093
      %v1128 = vpop.f32.mrb[0].mxu0
      %v1129 = vadd.f32 %v986, %v1128
      %v1130 = vpop.f32.mrb[0].mxu0
      %v1131 = vpop.f32.mrb[0].mxu0
      %v1132 = vadd.f32 %v986, %v1131
      %v1133 = vpop.f32.mrb[0].mxu0
      %1134 = vdwg.mxu0
      %v1135 = vpack.c.bf16 %v1132, %v1129
      %v1137 = vunpack.c.l.b16 %v1135
      %v1138 = vunpack.c.h.b16 %v1135
      %v1139 = vpack.c.b16 %v1137, %v1137
      %v1140 = vpack.c.b16 %v1138, %v1138
      %1143 = vst [vmem:[%s7] sm:$0xf] %v1139
      %1144 = vst [vmem:[%s7 + $0x4] sm:$0xf] %v1140
    $region37: #{_mlp_forward.1} parent=1 // pred_fallthru
      _
    // Predicated region
    $region38: #{_mlp_forward.1} parent=1 // pred_check
      _
    $region39: #{_mlp_forward.1} parent=1 // pred_check_branch
      %1146 = sbr.rel (0) target = $region41
    $region40: #{_mlp_forward.1} parent=1 // pred_region
      _
    $region41: #{_mlp_forward.1} parent=1 // pred_fallthru
      _
    // Predicated region
    $region42: #{_mlp_forward.1} parent=1 // pred_check
      _
    $region43: #{_mlp_forward.1} parent=1 // pred_check_branch
      %1148 = sbr.rel (0) target = $region45
    $region44: #{_mlp_forward.1} parent=1 // pred_region
      _
    $region45: #{_mlp_forward.1} parent=1 // pred_fallthru
      _
    // Predicated region
    $region46: #{_mlp_forward.1} parent=1 // pred_check
      _
    $region47: #{_mlp_forward.1} parent=1 // pred_check_branch
      %1150 = sbr.rel (0) target = $region49
    $region48: #{_mlp_forward.1} parent=1 // pred_region
      _
    $region49: #{_mlp_forward.1} parent=1 // pred_fallthru
      _
    // Predicated region
    $region50: #{_mlp_forward.1} parent=1 // pred_check
      _
    $region51: #{_mlp_forward.1} parent=1 // pred_check_branch
      %1152 = sbr.rel (0) target = $region53
    $region52: #{_mlp_forward.1} parent=1 // pred_region
      _
    $region53: #{_mlp_forward.1} parent=1 // pred_fallthru
      _
    %1153 = vsyncpa [#allocation5], 1

</llo_original>
